<compile_context>
chip_gen: v7x
topology: tpu7x:2x2x1
jax: 0.10.0
libtpu: 0.0.40
codegen_flags: <defaults>
</compile_context>

<pallas_src>
import jax
import jax.numpy as jnp
from jax import lax
from jax.experimental import pallas as pl
from jax.experimental.pallas import tpu as pltpu

LN_EPS = 1e-5  # nn.LayerNorm default


def _cdiv(a, b):
    return -(-a // b)


def _round_up(a, b):
    return _cdiv(a, b) * b


def _vmem_capacity_bytes():
    """Physical VMEM per TensorCore; conservative fallback if the query fails."""
    cap = 64 * 1024 * 1024  # safe on v5e/v6e (128 MiB) and v7x (64 MiB)
    try:
        info = pltpu.get_tpu_info()
        cap = int(getattr(info, "vmem_capacity_bytes", cap)) or cap
    except Exception:
        pass
    return cap


def _choose_tiles(m_pad, d_in, d_out, budget_bytes):
    """Row tile tm (multiple of 16, <=256) and lane-dense output tile tn."""
    tm = min(256, m_pad)

    if d_out < 128:
        tn_cands = [d_out]  # full-dim block (legal when equal to array dim)
    else:
        max_tn = _round_up(d_out, 128)
        tn_cands = [c for c in (1024, 512, 256, 128) if c <= max_tn] or [128]

    def footprint(tm_, tn_):
        # double-buffered: x tile + weight tile + out tile (all bf16)
        # + gamma/beta/bias (tiny).
        return (2 * (tm_ * d_in * 2 + d_in * tn_ * 2 + tm_ * tn_ * 2)
                + 2 * (2 * d_in * 2 + tn_ * 2))

    while True:
        for tn in tn_cands:
            if footprint(tm, tn) <= budget_bytes:
                return tm, tn
        if tm <= 16:
            return tm, tn_cands[-1]
        tm = max(16, (tm // 2 // 16) * 16)


def _condense_kernel(x_ref, g_ref, b_ref, w_ref, bias_ref, o_ref):
    # x_ref:    (tm, D_in)  bf16
    # g_ref:    (1, D_in)   bf16  (LN gamma)
    # b_ref:    (1, D_in)   bf16  (LN beta)
    # w_ref:    (D_in, tn)  bf16  (transposed nn.Linear weight slab)
    # bias_ref: (1, tn)     bf16
    # o_ref:    (tm, tn)    bf16
    xf = x_ref[...].astype(jnp.float32)                      # single f32 upcast
    mean = jnp.mean(xf, axis=-1, keepdims=True)
    centered = xf - mean
    var = jnp.mean(centered * centered, axis=-1, keepdims=True)   # E[(x-mean)^2]
    inv = lax.rsqrt(var + LN_EPS)

    gamma = g_ref[...].astype(jnp.float32)
    beta = b_ref[...].astype(jnp.float32)
    xn = ((centered * inv) * gamma + beta).astype(jnp.bfloat16)

    acc = jnp.dot(xn, w_ref[...], preferred_element_type=jnp.float32)
    acc = acc + bias_ref[...].astype(jnp.float32)
    o_ref[...] = acc.astype(o_ref.dtype)


@jax.jit
def condense_head(concated_hidden_states, ln_weight, ln_bias, lin_weight_t,
                  lin_bias):
    """Fused LayerNorm + Linear: self.linear(self.norm(x)).

    concated_hidden_states: [B, T, D_in]  bf16
    ln_weight, ln_bias:     [D_in]        bf16
    lin_weight_t:           [D_in, D_out] bf16 (transposed nn.Linear weight)
    lin_bias:               [D_out]       bf16
    returns:                [B, T, D_out] bf16
    """
    B, T, D_in = concated_hidden_states.shape
    D_out = lin_weight_t.shape[1]
    M = B * T

    cap = _vmem_capacity_bytes()
    vmem_limit = int(cap * 0.70)      # ~90 MiB on v5e/v6e, ~45 MiB on v7x
    tile_budget = int(cap * 0.625)    # ~80 MiB on v5e/v6e, ~40 MiB on v7x

    # Minimal row padding: only to the bf16 sublane multiple (16), not to tm.
    M_pad = _round_up(M, 16)
    x2d = concated_hidden_states.reshape(M, D_in)
    if M_pad != M:
        x2d = jnp.pad(x2d, ((0, M_pad - M), (0, 0)))

    tm, tn = _choose_tiles(M_pad, D_in, D_out, tile_budget)
    m_tiles = _cdiv(M_pad, tm)
    n_tiles = _cdiv(D_out, tn)

    gamma2d = ln_weight.reshape(1, D_in)
    beta2d = ln_bias.reshape(1, D_in)
    bias2d = lin_bias.reshape(1, D_out)

    # Grid order: keep the operand whose re-stream would cost more HBM traffic
    # invariant along the inner grid axis.
    weight_restream = (m_tiles - 1) * (D_in * D_out * 2)
    x_restream = (n_tiles - 1) * (M_pad * D_in * 2)
    m_inner = weight_restream > x_restream

    if m_inner:
        # grid = (N, M): weight block invariant along inner axis -> W read once.
        grid = (n_tiles, m_tiles)
        x_map = lambda j, i: (i, 0)
        vec_map = lambda j, i: (0, 0)
        w_map = lambda j, i: (0, j)
        nvec_map = lambda j, i: (0, j)
        out_map = lambda j, i: (i, j)
    else:
        # grid = (M, N): x block invariant along inner axis -> x read once.
        grid = (m_tiles, n_tiles)
        x_map = lambda i, j: (i, 0)
        vec_map = lambda i, j: (0, 0)
        w_map = lambda i, j: (0, j)
        nvec_map = lambda i, j: (0, j)
        out_map = lambda i, j: (i, j)

    out2d = pl.pallas_call(
        _condense_kernel,
        out_shape=jax.ShapeDtypeStruct((M_pad, D_out), jnp.bfloat16),
        grid_spec=pltpu.PrefetchScalarGridSpec(
            num_scalar_prefetch=0,
            grid=grid,
            in_specs=[
                pl.BlockSpec((tm, D_in), x_map),
                pl.BlockSpec((1, D_in), vec_map),
                pl.BlockSpec((1, D_in), vec_map),
                pl.BlockSpec((D_in, tn), w_map),
                pl.BlockSpec((1, tn), nvec_map),
            ],
            out_specs=pl.BlockSpec((tm, tn), out_map),
        ),
        compiler_params=pltpu.CompilerParams(
            dimension_semantics=("parallel", "parallel"),
            vmem_limit_bytes=vmem_limit,
        ),
    )(x2d, gamma2d, beta2d, lin_weight_t, bias2d)

    if M_pad != M:
        out2d = out2d[:M]
    return out2d.reshape(B, T, D_out)


def condenser_forward(concated_hidden_states, params, prompt_embeds=None):
    """Mirrors Condenser.forward's glue around the hot path."""
    # TODO(synk): the condense_model transformer forward (producing the last
    # n hidden states) and the decoder embedding lookup are external HF LLMs
    # with no single-kernel Pallas equivalent; synthetic tensors stand in.
    condensed_tokens = condense_head(
        concated_hidden_states,
        params["ln_weight"], params["ln_bias"],
        params["lin_weight_t"], params["lin_bias"],
    )
    inputs_embeds = None
    if prompt_embeds is not None:
        inputs_embeds = jnp.concatenate([condensed_tokens, prompt_embeds], axis=1)
    return condensed_tokens, inputs_embeds


def _reference(concated_hidden_states, params):
    # Unfused reference matching torch semantics (LN+affine in f32, bf16 GEMM
    # inputs with f32 accumulation).
    x = concated_hidden_states.astype(jnp.float32)
    mean = jnp.mean(x, axis=-1, keepdims=True)
    var = jnp.mean((x - mean) ** 2, axis=-1, keepdims=True)
    xn = (x - mean) * lax.rsqrt(var + LN_EPS)
    xn = (xn * params["ln_weight"].astype(jnp.float32)
          + params["ln_bias"].astype(jnp.float32))
    xn = xn.astype(jnp.bfloat16).astype(jnp.float32)
    y = jnp.dot(xn, params["lin_weight_t"].astype(jnp.float32))
    y = y + params["lin_bias"].astype(jnp.float32)
    return y.astype(jnp.bfloat16)


if __name__ == "__main__":
    # Small, module-consistent sizes.
    batch = 2
    num_condense_tokens = 8        # T
    hidden_size = 32               # condense_model.config.hidden_size
    n_last_hidden_states = 4
    base_model_hidden_size = 128   # decoder_model.config.hidden_size
    d_in = hidden_size * n_last_hidden_states          # 128
    prompt_len = 8

    key = jax.random.PRNGKey(0)
    k1, k2, k3, k4, k5 = jax.random.split(key, 5)

    # Deterministic synthetic "concatenated hidden states" (stand-in for the
    # condense_model output sliced to the last num_condense_tokens positions).
    concated_hidden_states = jax.random.normal(
        k1, (batch, num_condense_tokens, d_in), dtype=jnp.float32
    ).astype(jnp.bfloat16)

    # Condenser parameters (deterministic init, bf16 like the PyTorch module).
    params = {
        # LayerNorm init: weight=1, bias=0 (nn.LayerNorm default).
        "ln_weight": jnp.ones((d_in,), dtype=jnp.bfloat16),
        "ln_bias": jnp.zeros((d_in,), dtype=jnp.bfloat16),
        # nn.Linear(D_in, D_out): weight [D_out, D_in]; stored transposed.
        "lin_weight_t": (jax.random.normal(k2, (d_in, base_model_hidden_size),
                                           dtype=jnp.float32) * 0.02
                         ).astype(jnp.bfloat16),
        "lin_bias": (jax.random.normal(k3, (base_model_hidden_size,),
                                       dtype=jnp.float32) * 0.02
                     ).astype(jnp.bfloat16),
        # pre_condensed_tokens parameter (consumed upstream of the external
        # condense_model call; kept for shape fidelity).
        "pre_condensed_tokens": jax.random.normal(
            k4, (1, num_condense_tokens, hidden_size), dtype=jnp.float32
        ).astype(jnp.bfloat16),
    }

    # Stand-in for decoder_model.get_input_embeddings()(prompt_ids).
    prompt_embeds = jax.random.normal(
        k5, (batch, prompt_len, base_model_hidden_size), dtype=jnp.float32
    ).astype(jnp.bfloat16)

    condensed_tokens, inputs_embeds = condenser_forward(
        concated_hidden_states, params, prompt_embeds)
    condensed_tokens = jax.block_until_ready(condensed_tokens)
    inputs_embeds = jax.block_until_ready(inputs_embeds)

    assert condensed_tokens.shape == (batch, num_condense_tokens,
                                      base_model_hidden_size)
    assert condensed_tokens.dtype == jnp.bfloat16
    assert inputs_embeds.shape == (batch, num_condense_tokens + prompt_len,
                                   base_model_hidden_size)

    ref = _reference(concated_hidden_states, params)
    err = jnp.max(jnp.abs(condensed_tokens.astype(jnp.float32)
                          - ref.astype(jnp.float32)))
    assert float(err) < 5e-2, f"mismatch vs reference: {float(err)}"

    print("KERNEL_OK")
</pallas_src>

<mosaic_0001>
module attributes {stable_mosaic.version = 11 : i64} {
  func.func @_condense_kernel(%arg0: i32, %arg1: i32, %arg2: memref<16x128xbf16, #tpu.memory_space<vmem>>, %arg3: memref<1x128xbf16, #tpu.memory_space<vmem>>, %arg4: memref<1x128xbf16, #tpu.memory_space<vmem>>, %arg5: memref<128x128xbf16, #tpu.memory_space<vmem>>, %arg6: memref<1x128xbf16, #tpu.memory_space<vmem>>, %arg7: memref<16x128xbf16, #tpu.memory_space<vmem>>) attributes {dimension_semantics = [#tpu.dimension_semantics<parallel>, #tpu.dimension_semantics<parallel>], iteration_bounds = array<i64: 1, 1>, scalar_prefetch = 0 : i64, scratch_operands = 0 : i64, tpu.core_type = #tpu.core_type<tc>, window_params = [{transform_indices = @transform_0, window_bounds = array<i64: 16, 128>}, {pipeline_mode = #tpu.pipeline_mode<synchronous>, transform_indices = @transform_1, window_bounds = array<i64: 1, 128>}, {pipeline_mode = #tpu.pipeline_mode<synchronous>, transform_indices = @transform_2, window_bounds = array<i64: 1, 128>}, {transform_indices = @transform_3, window_bounds = array<i64: 128, 128>}, {transform_indices = @transform_4, window_bounds = array<i64: 1, 128>}, {transform_indices = @transform_5, window_bounds = array<i64: 16, 128>}]} {
    %c0 = arith.constant 0 : index
    %c0_0 = arith.constant 0 : index
    %0 = vector.load %arg2[%c0, %c0_0] : memref<16x128xbf16, #tpu.memory_space<vmem>>, vector<16x128xbf16>
    %1 = arith.extf %0 : vector<16x128xbf16> to vector<16x128xf32>
    %cst = arith.constant dense<0.000000e+00> : vector<16xf32>
    %2 = vector.multi_reduction <add>, %1, %cst [1] : vector<16x128xf32> to vector<16xf32>
    %3 = vector.shape_cast %2 : vector<16xf32> to vector<16x1xf32>
    %cst_1 = arith.constant 1.280000e+02 : f32
    %4 = vector.broadcast %cst_1 : f32 to vector<16x1xf32>
    %5 = arith.divf %3, %4 : vector<16x1xf32>
    %6 = vector.broadcast %5 : vector<16x1xf32> to vector<16x128xf32>
    %7 = arith.subf %1, %6 : vector<16x128xf32>
    %8 = arith.mulf %7, %7 : vector<16x128xf32>
    %cst_2 = arith.constant dense<0.000000e+00> : vector<16xf32>
    %9 = vector.multi_reduction <add>, %8, %cst_2 [1] : vector<16x128xf32> to vector<16xf32>
    %10 = vector.shape_cast %9 : vector<16xf32> to vector<16x1xf32>
    %cst_3 = arith.constant 1.280000e+02 : f32
    %11 = vector.broadcast %cst_3 : f32 to vector<16x1xf32>
    %12 = arith.divf %10, %11 : vector<16x1xf32>
    %cst_4 = arith.constant 9.99999974E-6 : f32
    %13 = vector.broadcast %cst_4 : f32 to vector<16x1xf32>
    %14 = arith.addf %12, %13 : vector<16x1xf32>
    %15 = math.rsqrt %14 : vector<16x1xf32>
    %c0_5 = arith.constant 0 : index
    %c0_6 = arith.constant 0 : index
    %16 = vector.load %arg3[%c0_5, %c0_6] : memref<1x128xbf16, #tpu.memory_space<vmem>>, vector<1x128xbf16>
    %17 = arith.extf %16 : vector<1x128xbf16> to vector<1x128xf32>
    %c0_7 = arith.constant 0 : index
    %c0_8 = arith.constant 0 : index
    %18 = vector.load %arg4[%c0_7, %c0_8] : memref<1x128xbf16, #tpu.memory_space<vmem>>, vector<1x128xbf16>
    %19 = arith.extf %18 : vector<1x128xbf16> to vector<1x128xf32>
    %20 = vector.broadcast %15 : vector<16x1xf32> to vector<16x128xf32>
    %21 = arith.mulf %7, %20 : vector<16x128xf32>
    %22 = vector.broadcast %17 : vector<1x128xf32> to vector<16x128xf32>
    %23 = arith.mulf %21, %22 : vector<16x128xf32>
    %24 = vector.broadcast %19 : vector<1x128xf32> to vector<16x128xf32>
    %25 = arith.addf %23, %24 : vector<16x128xf32>
    %26 = arith.truncf %25 : vector<16x128xf32> to vector<16x128xbf16>
    %c0_9 = arith.constant 0 : index
    %c0_10 = arith.constant 0 : index
    %27 = vector.load %arg5[%c0_9, %c0_10] : memref<128x128xbf16, #tpu.memory_space<vmem>>, vector<128x128xbf16>
    %cst_11 = arith.constant dense<0.000000e+00> : vector<16x128xf32>
    %28 = tpu.matmul %26, %27, %cst_11 {dimension_numbers = #tpu.dot_dimension_numbers<[1], [0], [0], [1], [0, 0, 1, 1], [], []>} : vector<16x128xbf16>, vector<128x128xbf16>, vector<16x128xf32> -> vector<16x128xf32>
    %c0_12 = arith.constant 0 : index
    %c0_13 = arith.constant 0 : index
    %29 = vector.load %arg6[%c0_12, %c0_13] : memref<1x128xbf16, #tpu.memory_space<vmem>>, vector<1x128xbf16>
    %30 = arith.extf %29 : vector<1x128xbf16> to vector<1x128xf32>
    %31 = vector.broadcast %30 : vector<1x128xf32> to vector<16x128xf32>
    %32 = arith.addf %28, %31 : vector<16x128xf32>
    %33 = arith.truncf %32 : vector<16x128xf32> to vector<16x128xbf16>
    %c0_14 = arith.constant 0 : index
    %c0_15 = arith.constant 0 : index
    %34 = vector.load %arg7[%c0_14, %c0_15] : memref<16x128xbf16, #tpu.memory_space<vmem>>, vector<16x128xbf16>
    tpu.vector_store %arg7[%c0_14, %c0_15], %33 {strides = array<i32>} : memref<16x128xbf16, #tpu.memory_space<vmem>>, vector<16x128xbf16>,
    return
  }
  func.func @transform_0(%arg0: i32, %arg1: i32) -> (i32, i32) {
    %c0_i32 = arith.constant 0 : i32
    %c0_i32_0 = arith.constant 0 : i32
    return %arg0, %c0_i32 : i32, i32
  }
  func.func @transform_1(%arg0: i32, %arg1: i32) -> (i32, i32) {
    %c0_i32 = arith.constant 0 : i32
    %c0_i32_0 = arith.constant 0 : i32
    %c0_i32_1 = arith.constant 0 : i32
    return %c0_i32, %c0_i32_0 : i32, i32
  }
  func.func @transform_2(%arg0: i32, %arg1: i32) -> (i32, i32) {
    %c0_i32 = arith.constant 0 : i32
    %c0_i32_0 = arith.constant 0 : i32
    %c0_i32_1 = arith.constant 0 : i32
    return %c0_i32, %c0_i32_0 : i32, i32
  }
  func.func @transform_3(%arg0: i32, %arg1: i32) -> (i32, i32) {
    %c0_i32 = arith.constant 0 : i32
    %c0_i32_0 = arith.constant 0 : i32
    return %c0_i32, %arg1 : i32, i32
  }
  func.func @transform_4(%arg0: i32, %arg1: i32) -> (i32, i32) {
    %c0_i32 = arith.constant 0 : i32
    %c0_i32_0 = arith.constant 0 : i32
    return %c0_i32, %arg1 : i32, i32
  }
  func.func @transform_5(%arg0: i32, %arg1: i32) -> (i32, i32) {
    %c0_i32 = arith.constant 0 : i32
    return %arg0, %arg1 : i32, i32
  }
}

</mosaic_0001>

<llo_original>
// kernel: condense_head.1
$region0: #{condense_head.1}
  #allocation0 [shape = 'u32[]', space=smem, size = 0x4, offset = 0x4, fixed_abs, tag = 'smem constant byte address 0x4 - core index']
  #allocation1 [shape = 'u32[144,128]{1,0:T(1,128)}', space=vmem, size = 0x12000, scoped, tag = 'internal scratch']
  %s0 = inlined_call_operand.vmem [shape: bf16[16,128], index: 0, kind: input, shape index: {}]
  %s1 = inlined_call_operand.vmem [shape: bf16[1,128], index: 1, kind: input, shape index: {}]
  %s2 = inlined_call_operand.vmem [shape: bf16[1,128], index: 2, kind: input, shape index: {}]
  %s3 = inlined_call_operand.hbm [shape: bf16[128,128], index: 3, kind: input, shape index: {}]
  %s4 = inlined_call_operand.vmem [shape: bf16[1,128], index: 4, kind: input, shape index: {}]
  %s5 = inlined_call_operand.hbm [shape: bf16[16,128], index: 5, kind: output, shape index: {}]
  %s6 = sld [smem:[#allocation0]]
  $region34: #{condense_head.1} parent=0
    _
  %s8 = ssub.s32 1, %s6
  %s9 = scalar_select 0, %s8, %s6
  $region1: #{condense_head.1} parent=0
    #allocation2 [shape = 'u8[32768]{0}', space=vmem, size = 0x8000, scoped, tag = 'input window, operand 3, single buffered']
    #allocation3 [shape = 's32[1]{0}', space=sflag, size = 0x4, scoped, tag = 'scoped memory for condense_head.1']
    #allocation4 [shape = 's32[1]{0}', space=sflag, size = 0x4, scoped, tag = 'scoped memory for condense_head.1']
    #allocation5 [shape = 'u8[4096]{0}', space=vmem, size = 0x1000, scoped, tag = 'output window, operand 0, single buffered']
    %10 = vsyncpa [#allocation3], 0
    %11 = vsyncpa [#allocation4], 0
    // Predicated region
    $region2: #{condense_head.1} parent=1 // pred_check
      _
    $region3: #{condense_head.1} parent=1 // pred_check_branch
      %13 = sbr.rel (0) target = $region5
    $region4: #{condense_head.1} parent=1 // pred_region
      _
    $region5: #{condense_head.1} parent=1 // pred_fallthru
      _
    // Predicated region
    $region6: #{condense_head.1} parent=1 // pred_check
      _
    $region7: #{condense_head.1} parent=1 // pred_check_branch
      %15 = sbr.rel (0) target = $region9
    $region8: #{condense_head.1} parent=1 // pred_region
      _
    $region9: #{condense_head.1} parent=1 // pred_fallthru
      _
    // Predicated region
    $region10: #{condense_head.1} parent=1 // pred_check
      _
    $region11: #{condense_head.1} parent=1 // pred_check_branch
      %17 = sbr.rel (0) target = $region13
    $region12: #{condense_head.1} parent=1 // pred_region
      _
    $region13: #{condense_head.1} parent=1 // pred_fallthru
      _
    // Predicated region
    $region14: #{condense_head.1} parent=1 // pred_check
      _
    $region15: #{condense_head.1} parent=1 // pred_check_branch
      %19 = sbr.rel (0) target = $region17
    $region16: #{condense_head.1} parent=1 // pred_region
      %s21 = ssub.s32 1024, 1024
      %22 = vsyncadd [#allocation3], %s21
      %s23 = sshll.u32 [#allocation2], 4
      %s24 = int_to_ptr.vmem [resolvable:$true] %s23
      %29 = dma.hbm_to_vmem [thread:$0]  %s3, 1024, %s24, [#allocation3], 64, 64, 4
    $region17: #{condense_head.1} parent=1 // pred_fallthru
      _
    // Predicated region
    $region18: #{condense_head.1} parent=1 // pred_check
      _
    $region19: #{condense_head.1} parent=1 // pred_check_branch
      %31 = sbr.rel (0) target = $region21
    $region20: #{condense_head.1} parent=1 // pred_region
      _
    $region21: #{condense_head.1} parent=1 // pred_fallthru
      _
    // Predicated region
    $region22: #{condense_head.1} parent=1 // pred_check
      _
    $region23: #{condense_head.1} parent=1 // pred_check_branch
      %33 = sbr.rel (0) target = $region25
    $region24: #{condense_head.1} parent=1 // pred_region
      %34 = dma.done [#allocation3], 1024
    $region25: #{condense_head.1} parent=1 // pred_fallthru
      _
    %v36 = vld [vmem:[%s0] sm:$0xf]
    %v37 = vld [vmem:[%s0 + $0x4] sm:$0xf]
    %v38 = vunpack.c.l.bf16 %v36
    %v39 = vunpack.c.l.bf16 %v37
    %40 = vadd.xlane.f32.xlu0 %v38
    %v41 = vpop.xlane.xlu0 %40
    %42 = vadd.xlane.f32.xlu0 %v39
    %v43 = vpop.xlane.xlu0 %42
    %v44 = vrcp.pop 128.0
    %v45 = vmul.f32 %v41, %v44
    %v46 = vmul.f32 %v43, %v44
    %v47 = vsub.f32 %v38, %v45
    %v48 = vsub.f32 %v39, %v46
    %v49 = vmul.f32 %v47, %v47
    %v50 = vmul.f32 %v48, %v48
    %51 = vadd.xlane.f32.xlu0 %v49
    %v52 = vpop.xlane.xlu0 %51
    %53 = vadd.xlane.f32.xlu0 %v50
    %v54 = vpop.xlane.xlu0 %53
    %v55 = vmul.f32 %v52, %v44
    %v56 = vmul.f32 %v54, %v44
    %v57 = vadd.f32 %v55, 1e-05
    %v58 = vadd.f32 %v56, 1e-05
    %v59 = vrsqrt.pop %v57
    %v60 = vrsqrt.pop %v58
    %v61 = vld [vmem:[%s1] sm:$0x1]
    %v62 = vunpack.c.l.bf16 %v61
    %v63 = vld [vmem:[%s2] sm:$0x1]
    %v64 = vunpack.c.l.bf16 %v63
    %v65 = vmul.f32 %v47, %v59
    %v66 = vmul.f32 %v48, %v60
    %v67 = vlaneseq
    %v68 = vshrl.u32 %v67, 7
    %v69 = vsub.s32 0, %v68
    %v70 = vrot.slane %v62, %v69
    %v71 = vmul.f32 %v65, %v70
    %v72 = vmul.f32 %v66, %v70
    %v73 = vlaneseq
    %v74 = vshrl.u32 %v73, 7
    %v75 = vsub.s32 0, %v74
    %v76 = vrot.slane %v64, %v75
    %v77 = vadd.f32 %v71, %v76
    %v78 = vadd.f32 %v72, %v76
    %v79 = vpack.c.bf16 %v78, %v77
    %v80 = vld [vmem:[#allocation2] sm:$0xf]
    %v81 = vld [vmem:[#allocation2 + $0x4] sm:$0xf]
    %v82 = vld [vmem:[#allocation2 + $0x8] sm:$0xf]
    %v83 = vld [vmem:[#allocation2 + $0xc] sm:$0xf]
    %v84 = vld [vmem:[#allocation2 + $0x10] sm:$0xf]
    %v85 = vld [vmem:[#allocation2 + $0x14] sm:$0xf]
    %v86 = vld [vmem:[#allocation2 + $0x18] sm:$0xf]
    %v87 = vld [vmem:[#allocation2 + $0x1c] sm:$0xf]
    %v88 = vld [vmem:[#allocation2 + $0x20] sm:$0xf]
    %v89 = vld [vmem:[#allocation2 + $0x24] sm:$0xf]
    %v90 = vld [vmem:[#allocation2 + $0x28] sm:$0xf]
    %v91 = vld [vmem:[#allocation2 + $0x2c] sm:$0xf]
    %v92 = vld [vmem:[#allocation2 + $0x30] sm:$0xf]
    %v93 = vld [vmem:[#allocation2 + $0x34] sm:$0xf]
    %v94 = vld [vmem:[#allocation2 + $0x38] sm:$0xf]
    %v95 = vld [vmem:[#allocation2 + $0x3c] sm:$0xf]
    %v96 = vld [vmem:[%s4] sm:$0x1]
    %v97 = vunpack.c.l.bf16 %v96
    %v98 = vlaneseq
    %v99 = vshrl.u32 %v98, 7
    %v100 = vsub.s32 0, %v99
    %v101 = vrot.slane %v97, %v100
    %v118 = vunpack.c.l.b16 %v80
    %v119 = vunpack.c.l.b16 %v81
    %v120 = vunpack.c.l.b16 %v82
    %v121 = vunpack.c.l.b16 %v83
    %v122 = vunpack.c.l.b16 %v84
    %v123 = vunpack.c.l.b16 %v85
    %v124 = vunpack.c.l.b16 %v86
    %v125 = vunpack.c.l.b16 %v87
    %v126 = vunpack.c.l.b16 %v88
    %v127 = vunpack.c.l.b16 %v89
    %v128 = vunpack.c.l.b16 %v90
    %v129 = vunpack.c.l.b16 %v91
    %v130 = vunpack.c.l.b16 %v92
    %v131 = vunpack.c.l.b16 %v93
    %v132 = vunpack.c.l.b16 %v94
    %v133 = vunpack.c.l.b16 %v95
    %v134 = vpack.c.b16 %v119, %v118
    %v135 = vpack.c.b16 %v121, %v120
    %v136 = vpack.c.b16 %v123, %v122
    %v137 = vpack.c.b16 %v125, %v124
    %v138 = vpack.c.b16 %v127, %v126
    %v139 = vpack.c.b16 %v129, %v128
    %v140 = vpack.c.b16 %v131, %v130
    %v141 = vpack.c.b16 %v133, %v132
    %150 = vmatprep.subr.bf16.mxu0 0
    %151 = vmatpush1.bf16.msra.mxu0 %v134
    %152 = vmatprep.subr.bf16.mxu0 0
    %153 = vmatpush1.bf16.msra.mxu0 %v135
    %154 = vmatprep.subr.bf16.mxu0 0
    %155 = vmatpush1.bf16.msra.mxu0 %v136
    %156 = vmatprep.subr.bf16.mxu0 0
    %157 = vmatpush1.bf16.msra.mxu0 %v137
    %158 = vmatprep.subr.bf16.mxu0 0
    %159 = vmatpush1.bf16.msra.mxu0 %v138
    %160 = vmatprep.subr.bf16.mxu0 0
    %161 = vmatpush1.bf16.msra.mxu0 %v139
    %162 = vmatprep.subr.bf16.mxu0 0
    %163 = vmatpush1.bf16.msra.mxu0 %v140
    %164 = vmatprep.subr.bf16.mxu0 0
    %165 = vmatpush1.bf16.msra.mxu0 %v141
    %166 = vmatprep.subr.bf16.mxu0 0
    %167 = vmatpush1.bf16.msra.mxu0 0
    %168 = vmatprep.subr.bf16.mxu0 0
    %169 = vmatpush1.bf16.msra.mxu0 0
    %170 = vmatprep.subr.bf16.mxu0 0
    %171 = vmatpush1.bf16.msra.mxu0 0
    %172 = vmatprep.subr.bf16.mxu0 0
    %173 = vmatpush1.bf16.msra.mxu0 0
    %174 = vmatprep.subr.bf16.mxu0 0
    %175 = vmatpush1.bf16.msra.mxu0 0
    %176 = vmatprep.subr.bf16.mxu0 0
    %177 = vmatpush1.bf16.msra.mxu0 0
    %178 = vmatprep.subr.bf16.mxu0 0
    %179 = vmatpush1.bf16.msra.mxu0 0
    %180 = vmatprep.subr.bf16.mxu0 0
    %181 = vmatpush1.bf16.msra.mxu0 0
    %182 = vmatprep.mubr.bf16.mxu0 0
    %183 = vmatmul.mubr.bf16.gmra.mrb[0].mxu0 %v79
    %v184 = vpop.f32.mrb[0].mxu0
    %v185 = vadd.f32 %v101, %v184
    %v186 = vpop.f32.mrb[0].mxu0
    %v187 = vpop.f32.mrb[0].mxu0
    %v188 = vadd.f32 %v101, %v187
    %v189 = vpop.f32.mrb[0].mxu0
    %190 = vdwg.mxu0
    %v191 = vpack.c.bf16 %v188, %v185
    %v193 = vunpack.c.l.b16 %v191
    %v194 = vunpack.c.h.b16 %v191
    %v195 = vpack.c.b16 %v193, %v193
    %v196 = vpack.c.b16 %v194, %v194
    %199 = vst [vmem:[#allocation5] sm:$0xf] %v195
    %200 = vst [vmem:[#allocation5 + $0x4] sm:$0xf] %v196
    // Predicated region
    $region26: #{condense_head.1} parent=1 // pred_check
      _
    $region27: #{condense_head.1} parent=1 // pred_check_branch
      %202 = sbr.rel (0) target = $region29
    $region28: #{condense_head.1} parent=1 // pred_region
      %s204 = ssub.s32 128, 128
      %205 = vsyncadd [#allocation4], %s204
      %s206 = sshll.u32 [#allocation5], 4
      %s207 = int_to_ptr.vmem [resolvable:$true] %s206
      %212 = dma.vmem_to_hbm [thread:$0]  %s207, 128, %s5, [#allocation4], 64, 64, 4
    $region29: #{condense_head.1} parent=1 // pred_fallthru
      _
    // Predicated region
    $region30: #{condense_head.1} parent=1 // pred_check
      _
    $region31: #{condense_head.1} parent=1 // pred_check_branch
      %214 = sbr.rel (0) target = $region33
    $region32: #{condense_head.1} parent=1 // pred_region
      %215 = dma.done [#allocation4], 128
    $region33: #{condense_head.1} parent=1 // pred_fallthru
      _
    %216 = vsyncpa [#allocation3], 1
    %217 = vsyncpa [#allocation4], 1

</llo_original>
